<compile_context>
chip_gen: v7x
topology: tpu7x:2x2x1
jax: 0.10.0
libtpu: 0.0.40
codegen_flags: <defaults>
</compile_context>

<pallas_src>
import functools

import jax
import jax.numpy as jnp
from jax.experimental import pallas as pl
from jax.experimental.pallas import tpu as pltpu


def _round_up(x, m):
    return ((x + m - 1) // m) * m


def _sublane_align(dtype):
    """Sublane alignment for a dtype: 8 rows for 4-byte, 16 for 2-byte, 32 for
    1-byte (packed sub-32-bit rows travel in pairs/quads)."""
    return {4: 8, 2: 16, 1: 32}.get(jnp.dtype(dtype).itemsize, 8)


def _pick_tile(total, align, max_tile):
    """Largest divisor of `total` that is a multiple of `align` and <= max_tile.
    Returns None if no such divisor exists (caller decides how to pad)."""
    best = None
    t = align
    limit = min(total, max_tile)
    while t <= limit:
        if total % t == 0:
            best = t
        t += align
    return best


def _vmem_capacity_bytes():
    """Physical VMEM per TensorCore; conservative 64 MiB (v7x) fallback."""
    try:
        info = pltpu.get_tpu_info()
    except Exception:
        return 64 * 1024 * 1024
    for name in ("vmem_capacity_bytes", "vmem_size_bytes", "vmem_bytes"):
        cap = getattr(info, name, None)
        if cap:
            return int(cap)
    return 64 * 1024 * 1024


def _choose_batch_tile(B, align):
    """Pick (TB, B_pad). Aims for >=4 (at least >=2) programs on the parallel
    batch axis so v7x's two TensorCores both get work; neutral on v5e/v6e."""
    if B <= align:
        return B, B
    tb_cap = min(256, max(align, _round_up((B + 3) // 4, align)))
    tb = _pick_tile(B, align, tb_cap)
    if tb is None:
        tb = _pick_tile(B, align, min(B, 256))
    if tb is not None:
        return tb, B
    # No aligned divisor at all: pad the batch (extra rows are sliced off).
    b_pad = _round_up(B, align)
    return _pick_tile(b_pad, align, tb_cap), b_pad


def _choose_seq_tile(S, align, ts_target):
    """Pick (TS, S_pad). Prefers an exact aligned divisor (no padding); if none
    exists, pads S with zeros to a bounded aligned tile instead of falling back
    to the full extent (which could blow the VMEM budget)."""
    if S <= align:
        return S, S
    ts_target = max(align, (ts_target // align) * align)
    ts = _pick_tile(S, align, ts_target)
    if ts is not None:
        return ts, S
    ts = min(ts_target, _round_up(S, align))
    return ts, _round_up(S, ts)


def _head_kernel_3d(x_ref, w_ref, b_ref, o_ref, acc_ref, *, inv_s):
    # x_ref: (TB, TS, D), w_ref: (D, Cpad), b_ref: (1, Cpad)
    # o_ref: (TB, Cpad),  acc_ref: (TB, D) f32 scratch
    k = pl.program_id(1)

    @pl.when(k == 0)
    def _():
        acc_ref[...] = jnp.zeros_like(acc_ref)

    # Sequence-sum of this tile, accumulated in f32.
    # NOTE: for bf16/int8 x on v7x this VPU sum could instead ride the (idle)
    # MXU via a ones-vector contraction; kept on the VPU here for portability.
    acc_ref[...] += jnp.sum(x_ref[...], axis=1, dtype=jnp.float32)

    @pl.when(k == pl.num_programs(1) - 1)
    def _():
        mean = acc_ref[...] * inv_s                                   # (TB, D) f32
        # For bf16 weights this casts the f32 mean back to bf16 before the MXU
        # (one extra rounding step vs. an all-f32 reference).
        y = jnp.dot(mean.astype(w_ref.dtype), w_ref[...],
                    preferred_element_type=jnp.float32)               # (TB, Cpad)
        o_ref[...] = (y + b_ref[...].astype(jnp.float32)).astype(o_ref.dtype)


def _head_kernel_2d(x_ref, w_ref, b_ref, o_ref):
    # x_ref: (TB, D), w_ref: (D, TC), b_ref: (1, TC), o_ref: (TB, TC)
    y = jnp.dot(x_ref[...], w_ref[...], preferred_element_type=jnp.float32)
    o_ref[...] = (y + b_ref[...].astype(jnp.float32)).astype(o_ref.dtype)


def classification_head(x, weight, bias):
    """Pallas equivalent of ClassificationHead.forward.

    x:      (B, S, D) or (B, D)
    weight: (D, C)   (transposed relative to PyTorch's (C, D))
    bias:   (C,)
    returns (B, C)
    """
    D, C = weight.shape

    # Lane-dense output: pad C to a multiple of 128 (zero columns are free on
    # the MXU and are sliced off afterwards).
    C_pad = _round_up(C, 128)
    if C_pad != C:
        weight = jnp.pad(weight, ((0, 0), (0, C_pad - C)))
        bias = jnp.pad(bias, (0, C_pad - C))
    b2d = bias.reshape(1, C_pad)
    w_itemsize = jnp.dtype(weight.dtype).itemsize

    vmem_cap = _vmem_capacity_bytes()
    budget = int(vmem_cap * 0.75)          # generation-aware, with headroom

    if x.ndim == 3:
        B, S, _ = x.shape
        itemsize = jnp.dtype(x.dtype).itemsize
        align = _sublane_align(x.dtype)

        # Small-ish batch tile (>= 2 programs for megacore), large sequence tile.
        TB, B_pad = _choose_batch_tile(B, align)

        # Fixed (non-streamed) VMEM: weight (single-buffered via Buffered(1)),
        # bias, double-buffered output, f32 accumulator.
        w_bytes = D * C_pad * w_itemsize
        fixed = (w_bytes + 2 * C_pad * w_itemsize
                 + 2 * TB * C_pad * itemsize + TB * D * 4)
        # Streamed x tiles: give the rest of the budget to 2 buffers, capped at
        # 32 MiB each (diminishing returns beyond that even at v7x's 3.2 TB/s).
        x_buf_budget = max(2 * 1024 * 1024, (budget - fixed) // 2)
        x_buf_budget = min(x_buf_budget, 32 * 1024 * 1024)
        ts_target = max(align, x_buf_budget // max(1, TB * D * itemsize))
        TS, S_pad = _choose_seq_tile(S, align, ts_target)

        if B_pad != B or S_pad != S:
            # Zero padding: does not change the sequence sum; padded batch rows
            # are sliced off below.
            x = jnp.pad(x, ((0, B_pad - B), (0, S_pad - S), (0, 0)))

        grid = (B_pad // TB, S_pad // TS)
        kernel = functools.partial(_head_kernel_3d, inv_s=1.0 / S)

        x_tile_bytes = TB * TS * D * itemsize
        # Conservative need: count the weight twice in case the compiler still
        # double-buffers it; limit is clamped to physical VMEM.
        need = 2 * x_tile_bytes + fixed + w_bytes
        vmem_limit = int(min(max(int(need * 1.3), 32 * 1024 * 1024),
                             int(vmem_cap * 0.85)))
        vmem_limit = max(vmem_limit, min(need, int(vmem_cap * 0.95)))

        # TODO(synk): for very large heads (D*C_pad of tens of MiB) the weight
        # should also be tiled along C_pad; kept fully resident here.
        out_pad = pl.pallas_call(
            kernel,
            out_shape=jax.ShapeDtypeStruct((B_pad, C_pad), x.dtype),
            grid_spec=pltpu.PrefetchScalarGridSpec(
                num_scalar_prefetch=0,
                grid=grid,
                in_specs=[
                    # Streamed x tile (default double-buffering).
                    pl.BlockSpec((TB, TS, D), lambda i, k: (i, k, 0)),
                    # Grid-invariant weight/bias: single buffer is enough.
                    pl.BlockSpec((D, C_pad), lambda i, k: (0, 0),
                                 pipeline_mode=pl.Buffered(1)),
                    pl.BlockSpec((1, C_pad), lambda i, k: (0, 0),
                                 pipeline_mode=pl.Buffered(1)),
                ],
                out_specs=pl.BlockSpec((TB, C_pad), lambda i, k: (i, 0)),
                scratch_shapes=[pltpu.VMEM((TB, D), jnp.float32)],
            ),
            compiler_params=pltpu.CompilerParams(
                dimension_semantics=("parallel", "arbitrary"),
                vmem_limit_bytes=vmem_limit,
            ),
        )(x, weight, b2d)

        out = out_pad[:B] if B_pad != B else out_pad

    elif x.ndim == 2:
        B, _ = x.shape
        itemsize = jnp.dtype(x.dtype).itemsize
        align = _sublane_align(x.dtype)

        TB, B_pad = _choose_batch_tile(B, align)
        if B_pad != B:
            x = jnp.pad(x, ((0, B_pad - B), (0, 0)))

        # Tile the class dim so a large head streams through VMEM instead of
        # requiring the whole (D, C_pad) weight resident (and double-buffered).
        tc_budget = min(8 * 1024 * 1024, max(512 * 1024, budget // 8))
        tc_target = max(128, (tc_budget // max(1, D * w_itemsize)) // 128 * 128)
        TC = _pick_tile(C_pad, 128, tc_target) or C_pad
        grid = (B_pad // TB, C_pad // TC)

        need = (2 * TB * D * itemsize + 2 * D * TC * w_itemsize
                + 2 * TC * w_itemsize + 2 * TB * TC * itemsize)
        vmem_limit = int(min(max(int(need * 1.5), 16 * 1024 * 1024),
                             int(vmem_cap * 0.85)))

        out_pad = pl.pallas_call(
            _head_kernel_2d,
            out_shape=jax.ShapeDtypeStruct((B_pad, C_pad), x.dtype),
            grid_spec=pltpu.PrefetchScalarGridSpec(
                num_scalar_prefetch=0,
                grid=grid,
                in_specs=[
                    pl.BlockSpec((TB, D), lambda i, j: (i, 0)),
                    pl.BlockSpec((D, TC), lambda i, j: (0, j)),
                    pl.BlockSpec((1, TC), lambda i, j: (0, j)),
                ],
                out_specs=pl.BlockSpec((TB, TC), lambda i, j: (i, j)),
            ),
            compiler_params=pltpu.CompilerParams(
                dimension_semantics=("parallel", "parallel"),
                vmem_limit_bytes=vmem_limit,
            ),
        )(x, weight, b2d)

        out = out_pad[:B] if B_pad != B else out_pad
    else:
        raise ValueError(f"unsupported x.ndim={x.ndim}")

    return out[:, :C] if C_pad != C else out


if __name__ == "__main__":
    # Small, deterministic setup: batch=2, seq=8, input_dim=32, num_classes=16
    B, S, D, C = 2, 8, 32, 16

    key = jax.random.PRNGKey(0)
    kx, kw, kb = jax.random.split(key, 3)

    x = jax.random.normal(kx, (B, S, D), dtype=jnp.float32)

    # Deterministic parameter init mimicking nn.Linear: U(-1/sqrt(D), 1/sqrt(D))
    bound = 1.0 / (D ** 0.5)
    weight = jax.random.uniform(kw, (D, C), minval=-bound, maxval=bound,
                                dtype=jnp.float32)  # stored as (in, out)
    bias = jax.random.uniform(kb, (C,), minval=-bound, maxval=bound,
                              dtype=jnp.float32)

    # 3-D path: mean over seq then Linear.
    out = classification_head(x, weight, bias)
    out = jax.block_until_ready(out)
    ref = jnp.mean(x, axis=1) @ weight + bias
    assert out.shape == (B, C)
    assert jnp.allclose(out, ref, atol=1e-5, rtol=1e-5)

    # 2-D path: plain Linear.
    x2 = jax.random.normal(jax.random.PRNGKey(1), (B, D), dtype=jnp.float32)
    out2 = jax.block_until_ready(classification_head(x2, weight, bias))
    ref2 = x2 @ weight + bias
    assert out2.shape == (B, C)
    assert jnp.allclose(out2, ref2, atol=1e-5, rtol=1e-5)

    print("KERNEL_OK")
</pallas_src>

<mosaic_0001>
module attributes {stable_mosaic.version = 11 : i64} {
  func.func @_head_kernel_3d(%arg0: i32, %arg1: i32, %arg2: memref<2x8x32xf32, #tpu.memory_space<vmem>>, %arg3: memref<32x128xf32, #tpu.memory_space<vmem>>, %arg4: memref<1x128xf32, #tpu.memory_space<vmem>>, %arg5: memref<2x128xf32, #tpu.memory_space<vmem>>, %arg6: memref<2x32xf32, #tpu.memory_space<vmem>>) attributes {dimension_semantics = [#tpu.dimension_semantics<parallel>, #tpu.dimension_semantics<arbitrary>], iteration_bounds = array<i64: 1, 1>, scalar_prefetch = 0 : i64, scratch_operands = 1 : i64, tpu.core_type = #tpu.core_type<tc>, window_params = [{transform_indices = @transform_0, window_bounds = array<i64: 2, 8, 32>}, {pipeline_mode = #tpu.pipeline_mode<synchronous>, transform_indices = @transform_1, window_bounds = array<i64: 32, 128>}, {pipeline_mode = #tpu.pipeline_mode<synchronous>, transform_indices = @transform_2, window_bounds = array<i64: 1, 128>}, {transform_indices = @transform_3, window_bounds = array<i64: 2, 128>}]} {
    %c0_i32 = arith.constant 0 : i32
    %0 = arith.cmpi eq, %arg1, %c0_i32 : i32
    %1 = arith.extui %0 : i1 to i32
    %c0_i32_0 = arith.constant 0 : i32
    %2 = arith.cmpi ne, %1, %c0_i32_0 : i32
    scf.if %2 {
      %cst_9 = arith.constant 0.000000e+00 : f32
      %11 = vector.broadcast %cst_9 : f32 to vector<2x32xf32>
      %c0_10 = arith.constant 0 : index
      %c0_11 = arith.constant 0 : index
      %12 = vector.load %arg6[%c0_10, %c0_11] : memref<2x32xf32, #tpu.memory_space<vmem>>, vector<2x32xf32>
      tpu.vector_store %arg6[%c0_10, %c0_11], %11 {strides = array<i32>} : memref<2x32xf32, #tpu.memory_space<vmem>>, vector<2x32xf32>,
    } else {
    }
    %c0 = arith.constant 0 : index
    %c0_1 = arith.constant 0 : index
    %3 = vector.load %arg6[%c0, %c0_1] : memref<2x32xf32, #tpu.memory_space<vmem>>, vector<2x32xf32>
    %c0_2 = arith.constant 0 : index
    %c0_3 = arith.constant 0 : index
    %c0_4 = arith.constant 0 : index
    %4 = vector.load %arg2[%c0_2, %c0_3, %c0_4] : memref<2x8x32xf32, #tpu.memory_space<vmem>>, vector<2x8x32xf32>
    %cst = arith.constant dense<0.000000e+00> : vector<2x32xf32>
    %5 = vector.multi_reduction <add>, %4, %cst [1] : vector<2x8x32xf32> to vector<2x32xf32>
    %6 = arith.addf %3, %5 : vector<2x32xf32>
    %c0_5 = arith.constant 0 : index
    %c0_6 = arith.constant 0 : index
    %7 = vector.load %arg6[%c0_5, %c0_6] : memref<2x32xf32, #tpu.memory_space<vmem>>, vector<2x32xf32>
    tpu.vector_store %arg6[%c0_5, %c0_6], %6 {strides = array<i32>} : memref<2x32xf32, #tpu.memory_space<vmem>>, vector<2x32xf32>,
    %c0_i32_7 = arith.constant 0 : i32
    %8 = arith.cmpi eq, %arg1, %c0_i32_7 : i32
    %9 = arith.extui %8 : i1 to i32
    %c0_i32_8 = arith.constant 0 : i32
    %10 = arith.cmpi ne, %9, %c0_i32_8 : i32
    scf.if %10 {
      %c0_9 = arith.constant 0 : index
      %c0_10 = arith.constant 0 : index
      %11 = vector.load %arg6[%c0_9, %c0_10] : memref<2x32xf32, #tpu.memory_space<vmem>>, vector<2x32xf32>
      %cst_11 = arith.constant 1.250000e-01 : f32
      %12 = vector.broadcast %cst_11 : f32 to vector<2x32xf32>
      %13 = arith.mulf %11, %12 : vector<2x32xf32>
      %c0_12 = arith.constant 0 : index
      %c0_13 = arith.constant 0 : index
      %14 = vector.load %arg3[%c0_12, %c0_13] : memref<32x128xf32, #tpu.memory_space<vmem>>, vector<32x128xf32>
      %cst_14 = arith.constant dense<0.000000e+00> : vector<2x128xf32>
      %15 = tpu.matmul %13, %14, %cst_14 {dimension_numbers = #tpu.dot_dimension_numbers<[1], [0], [0], [1], [0, 0, 1, 1], [], []>} : vector<2x32xf32>, vector<32x128xf32>, vector<2x128xf32> -> vector<2x128xf32>
      %c0_15 = arith.constant 0 : index
      %c0_16 = arith.constant 0 : index
      %16 = vector.load %arg4[%c0_15, %c0_16] : memref<1x128xf32, #tpu.memory_space<vmem>>, vector<1x128xf32>
      %17 = vector.broadcast %16 : vector<1x128xf32> to vector<2x128xf32>
      %18 = arith.addf %15, %17 : vector<2x128xf32>
      %c0_17 = arith.constant 0 : index
      %c0_18 = arith.constant 0 : index
      %19 = vector.load %arg5[%c0_17, %c0_18] : memref<2x128xf32, #tpu.memory_space<vmem>>, vector<2x128xf32>
      tpu.vector_store %arg5[%c0_17, %c0_18], %18 {strides = array<i32>} : memref<2x128xf32, #tpu.memory_space<vmem>>, vector<2x128xf32>,
    } else {
    }
    return
  }
  func.func @transform_0(%arg0: i32, %arg1: i32) -> (i32, i32, i32) {
    %c0_i32 = arith.constant 0 : i32
    %c0_i32_0 = arith.constant 0 : i32
    return %arg0, %arg1, %c0_i32 : i32, i32, i32
  }
  func.func @transform_1(%arg0: i32, %arg1: i32) -> (i32, i32) {
    %c0_i32 = arith.constant 0 : i32
    %c0_i32_0 = arith.constant 0 : i32
    %c0_i32_1 = arith.constant 0 : i32
    return %c0_i32, %c0_i32_0 : i32, i32
  }
  func.func @transform_2(%arg0: i32, %arg1: i32) -> (i32, i32) {
    %c0_i32 = arith.constant 0 : i32
    %c0_i32_0 = arith.constant 0 : i32
    %c0_i32_1 = arith.constant 0 : i32
    return %c0_i32, %c0_i32_0 : i32, i32
  }
  func.func @transform_3(%arg0: i32, %arg1: i32) -> (i32, i32) {
    %c0_i32 = arith.constant 0 : i32
    %c0_i32_0 = arith.constant 0 : i32
    return %arg0, %c0_i32 : i32, i32
  }
}

</mosaic_0001>

<llo_original>
// kernel: tpu_custom_call.1
$region0: #{tpu_custom_call.1}
  #allocation0 [shape = 'u32[]', space=smem, size = 0x4, offset = 0x4, fixed_abs, tag = 'smem constant byte address 0x4 - core index']
  #allocation1 [shape = 'u32[144,128]{1,0:T(1,128)}', space=vmem, size = 0x12000, scoped, tag = 'internal scratch']
  #allocation2 [shape = 'f32[2,32]{1,0:T(2,128)}', space=vmem, size = 0x400, scoped, tag = 'scratch operand']
  %s0 = inlined_call_operand.hbm [shape: f32[2,8,32], index: 0, kind: input, shape index: {}]
  %s1 = inlined_call_operand.hbm [shape: f32[32,128], index: 1, kind: input, shape index: {}]
  %s2 = inlined_call_operand.vmem [shape: f32[1,128], index: 2, kind: input, shape index: {}]
  %s3 = inlined_call_operand.hbm [shape: f32[2,128], index: 3, kind: output, shape index: {}]
  %s4 = sld [smem:[#allocation0]]
  $region38: #{tpu_custom_call.1} parent=0
    _
  %s6 = ssub.s32 1, %s4
  %s7 = scalar_select 0, %s6, %s4
  $region1: #{tpu_custom_call.1} parent=0
    #allocation3 [shape = 'u8[8192]{0}', space=vmem, size = 0x2000, scoped, tag = 'input window, operand 0, single buffered']
    #allocation4 [shape = 's32[1]{0}', space=sflag, size = 0x4, scoped, tag = 'scoped memory for tpu_custom_call.1']
    #allocation5 [shape = 's32[1]{0}', space=sflag, size = 0x4, scoped, tag = 'scoped memory for tpu_custom_call.1']
    #allocation6 [shape = 'u8[16384]{0}', space=vmem, size = 0x4000, scoped, tag = 'input window, operand 1, single buffered']
    #allocation7 [shape = 's32[1]{0}', space=sflag, size = 0x4, scoped, tag = 'scoped memory for tpu_custom_call.1']
    #allocation8 [shape = 'u8[1024]{0}', space=vmem, size = 0x400, scoped, tag = 'output window, operand 0, single buffered']
    %8 = vsyncpa [#allocation4], 0
    %9 = vsyncpa [#allocation7], 0
    %10 = vsyncpa [#allocation5], 0
    // Predicated region
    $region2: #{tpu_custom_call.1} parent=1 // pred_check
      _
    $region3: #{tpu_custom_call.1} parent=1 // pred_check_branch
      %12 = sbr.rel (0) target = $region5
    $region4: #{tpu_custom_call.1} parent=1 // pred_region
      %s14 = ssub.s32 256, 256
      %15 = vsyncadd [#allocation4], %s14
      %s16 = sshll.u32 [#allocation3], 4
      %s17 = int_to_ptr.vmem [resolvable:$true] %s16
      %22 = dma.hbm_to_vmem [thread:$0]  %s0, 256, %s17, [#allocation4], 128, 128, 8
    $region5: #{tpu_custom_call.1} parent=1 // pred_fallthru
      _
    // Predicated region
    $region6: #{tpu_custom_call.1} parent=1 // pred_check
      _
    $region7: #{tpu_custom_call.1} parent=1 // pred_check_branch
      %24 = sbr.rel (0) target = $region9
    $region8: #{tpu_custom_call.1} parent=1 // pred_region
      %s26 = ssub.s32 512, 512
      %27 = vsyncadd [#allocation7], %s26
      %s28 = sshll.u32 [#allocation6], 4
      %s29 = int_to_ptr.vmem [resolvable:$true] %s28
      %34 = dma.hbm_to_vmem [thread:$0]  %s1, 512, %s29, [#allocation7], 128, 128, 8
    $region9: #{tpu_custom_call.1} parent=1 // pred_fallthru
      _
    // Predicated region
    $region10: #{tpu_custom_call.1} parent=1 // pred_check
      _
    $region11: #{tpu_custom_call.1} parent=1 // pred_check_branch
      %36 = sbr.rel (0) target = $region13
    $region12: #{tpu_custom_call.1} parent=1 // pred_region
      _
    $region13: #{tpu_custom_call.1} parent=1 // pred_fallthru
      _
    // Predicated region
    $region14: #{tpu_custom_call.1} parent=1 // pred_check
      _
    $region15: #{tpu_custom_call.1} parent=1 // pred_check_branch
      %38 = sbr.rel (0) target = $region17
    $region16: #{tpu_custom_call.1} parent=1 // pred_region
      %39 = dma.done [#allocation4], 256
    $region17: #{tpu_custom_call.1} parent=1 // pred_fallthru
      _
    // Predicated region
    $region18: #{tpu_custom_call.1} parent=1 // pred_check
      _
    $region19: #{tpu_custom_call.1} parent=1 // pred_check_branch
      %41 = sbr.rel (0) target = $region21
    $region20: #{tpu_custom_call.1} parent=1 // pred_region
      %42 = dma.done [#allocation7], 512
    $region21: #{tpu_custom_call.1} parent=1 // pred_fallthru
      _
    %p43 = scmp.eq.s32.totalorder 0, 0
    // Predicated region
    $region22: #{tpu_custom_call.1} parent=1 // pred_check
      %p44 = pneg %p43
    $region23: #{tpu_custom_call.1} parent=1 // pred_check_branch
      %46 = sbr.rel (%p44) target = $region25
    $region24: #{tpu_custom_call.1} parent=1 // pred_region
      %vm47 = vcmask 254976
      %48 = vst.msk [vmem:[#allocation2] sm:$0x3] %vm47, 0.0
    $region25: #{tpu_custom_call.1} parent=1 // pred_fallthru
      _
    %v49 = vld [vmem:[#allocation2] sm:$0x3]
    %v50 = vld [vmem:[#allocation3] sm:$0xff]
    %v51 = vld [vmem:[#allocation3 + $0x8] sm:$0xff]
    %vm52 = vcmask 261120
    %v53 = vsel %vm52, %v50, 0.0
    %v54 = vrot.slane %v53, 4
    %v55 = vadd.f32 %v53, %v54
    %v56 = vrot.slane %v55, 2
    %v57 = vadd.f32 %v55, %v56
    %v58 = vrot.slane %v57, 1
    %v59 = vadd.f32 %v57, %v58
    %v60 = vsel %vm52, %v51, 0.0
    %v61 = vrot.slane %v60, 4
    %v62 = vadd.f32 %v60, %v61
    %v63 = vrot.slane %v62, 2
    %v64 = vadd.f32 %v62, %v63
    %v65 = vrot.slane %v64, 1
    %v66 = vadd.f32 %v64, %v65
    %vm69 = vcmask 1041409
    %v70 = vsel %vm69, %v66, %v59
    %v72 = vadd.f32 %v49, %v70
    %vm73 = vcmask 254976
    %74 = vst.msk [vmem:[#allocation2] sm:$0x3] %vm73, %v72
    // Predicated region
    $region26: #{tpu_custom_call.1} parent=1 // pred_check
      %p75 = pneg %p43
    $region27: #{tpu_custom_call.1} parent=1 // pred_check_branch
      %77 = sbr.rel (%p75) target = $region29
    $region28: #{tpu_custom_call.1} parent=1 // pred_region
      %v78 = vld [vmem:[#allocation2] sm:$0x3]
      %v79 = vmul.f32 %v78, 0.125
      %v80 = vld [vmem:[#allocation6] sm:$0xff]
      %v81 = vld [vmem:[#allocation6 + $0x8] sm:$0xff]
      %v82 = vld [vmem:[#allocation6 + $0x10] sm:$0xff]
      %v83 = vld [vmem:[#allocation6 + $0x18] sm:$0xff]
      %v84 = vld [vmem:[%s2] sm:$0x1]
      %v86 = vlaneseq
      %v87 = vshrl.u32 %v86, 7
      %v88 = vsub.s32 0, %v87
      %v89 = vrot.slane %v84, %v88
      %v92 = vsel %vm52, %v79, 0
      %94 = vmatprep.subr.mxu0 0.0
      %95 = vmatpush1.msra.mxu0 %v80
      %96 = vmatprep.subr.mxu0 0.0
      %97 = vmatpush1.msra.mxu0 %v81
      %98 = vmatprep.subr.mxu0 0.0
      %99 = vmatpush1.msra.mxu0 %v82
      %100 = vmatprep.subr.mxu0 0.0
      %101 = vmatpush1.msra.mxu0 %v83
      %102 = vmatprep.subr.mxu0 0.0
      %103 = vmatpush1.msra.mxu0 0.0
      %104 = vmatprep.subr.mxu0 0.0
      %105 = vmatpush1.msra.mxu0 0.0
      %106 = vmatprep.subr.mxu0 0.0
      %107 = vmatpush1.msra.mxu0 0.0
      %108 = vmatprep.subr.mxu0 0.0
      %109 = vmatpush1.msra.mxu0 0.0
      %110 = vmatprep.subr.mxu0 0.0
      %111 = vmatpush1.msra.mxu0 0.0
      %112 = vmatprep.subr.mxu0 0.0
      %113 = vmatpush1.msra.mxu0 0.0
      %114 = vmatprep.subr.mxu0 0.0
      %115 = vmatpush1.msra.mxu0 0.0
      %116 = vmatprep.subr.mxu0 0.0
      %117 = vmatpush1.msra.mxu0 0.0
      %118 = vmatprep.subr.mxu0 0.0
      %119 = vmatpush1.msra.mxu0 0.0
      %120 = vmatprep.subr.mxu0 0.0
      %121 = vmatpush1.msra.mxu0 0.0
      %122 = vmatprep.subr.mxu0 0.0
      %123 = vmatpush1.msra.mxu0 0.0
      %124 = vmatprep.subr.mxu0 0.0
      %125 = vmatpush1.msra.mxu0 0.0
      %126 = vmatprep.subr.mxu0 0.0
      %127 = vmatpush1.msra.mxu0 0.0
      %128 = vmatprep.subr.mxu0 0.0
      %129 = vmatpush1.msra.mxu0 0.0
      %130 = vmatprep.subr.mxu0 0.0
      %131 = vmatpush1.msra.mxu0 0.0
      %132 = vmatprep.subr.mxu0 0.0
      %133 = vmatpush1.msra.mxu0 0.0
      %134 = vmatprep.subr.mxu0 0.0
      %135 = vmatpush1.msra.mxu0 0.0
      %136 = vmatprep.subr.mxu0 0.0
      %137 = vmatpush1.msra.mxu0 0.0
      %138 = vmatprep.subr.mxu0 0.0
      %139 = vmatpush1.msra.mxu0 0.0
      %140 = vmatprep.subr.mxu0 0.0
      %141 = vmatpush1.msra.mxu0 0.0
      %142 = vmatprep.subr.mxu0 0.0
      %143 = vmatpush1.msra.mxu0 0.0
      %144 = vmatprep.subr.mxu0 0.0
      %145 = vmatpush1.msra.mxu0 0.0
      %146 = vmatprep.subr.mxu0 0.0
      %147 = vmatpush1.msra.mxu0 0.0
      %148 = vmatprep.subr.mxu0 0.0
      %149 = vmatpush1.msra.mxu0 0.0
      %150 = vmatprep.subr.mxu0 0.0
      %151 = vmatpush1.msra.mxu0 0.0
      %152 = vmatprep.subr.mxu0 0.0
      %153 = vmatpush1.msra.mxu0 0.0
      %154 = vmatprep.subr.mxu0 0.0
      %155 = vmatpush1.msra.mxu0 0.0
      %156 = vmatprep.subr.mxu0 0.0
      %157 = vmatpush1.msra.mxu0 0.0
      %158 = vmatprep.mubr.f32.mxu0 0.0
      %159 = vmatmul.mubr.f32.gmra.mrb[0].mxu0 %v92
      %v160 = vpop.f32.mrb[0].mxu0
      %v161 = vadd.f32 %v89, %v160
      %v162 = vpop.f32.mrb[0].mxu0
      %163 = vdwg.mxu0
      %164 = vst [vmem:[#allocation8] sm:$0x3] %v161
    $region29: #{tpu_custom_call.1} parent=1 // pred_fallthru
      _
    // Predicated region
    $region30: #{tpu_custom_call.1} parent=1 // pred_check
      _
    $region31: #{tpu_custom_call.1} parent=1 // pred_check_branch
      %166 = sbr.rel (0) target = $region33
    $region32: #{tpu_custom_call.1} parent=1 // pred_region
      %s168 = ssub.s32 32, 32
      %169 = vsyncadd [#allocation5], %s168
      %s171 = sshll.u32 [#allocation8], 4
      %s172 = int_to_ptr.vmem [resolvable:$true] %s171
      %174 = dma.vmem_to_hbm [thread:$0]  %s172, 32, %s3, [#allocation5]
    $region33: #{tpu_custom_call.1} parent=1 // pred_fallthru
      _
    // Predicated region
    $region34: #{tpu_custom_call.1} parent=1 // pred_check
      _
    $region35: #{tpu_custom_call.1} parent=1 // pred_check_branch
      %176 = sbr.rel (0) target = $region37
    $region36: #{tpu_custom_call.1} parent=1 // pred_region
      %177 = dma.done [#allocation5], 32
    $region37: #{tpu_custom_call.1} parent=1 // pred_fallthru
      _
    %178 = vsyncpa [#allocation4], 1
    %179 = vsyncpa [#allocation7], 1
    %180 = vsyncpa [#allocation5], 1

</llo_original>
